<compile_context>
chip_gen: v5e
topology: v5e:2x2
jax: 0.10.0
libtpu: 0.0.40
codegen_flags: <defaults>
</compile_context>

<pallas_src>
import functools

import numpy as np
import jax
import jax.numpy as jnp
from jax.experimental import pallas as pl
from jax.experimental.pallas import tpu as pltpu

EPS = 1e-5


def _resblock_kernel(K, W, x_ref, mask_ref, w1_ref, b1_ref, g1_ref, be1_ref,
                     w2_ref, b2_ref, g2_ref, be2_ref, out_ref):
    B, C, HW = x_ref.shape
    NPIX = B * HW
    P = K // 2
    MAXS = P * W + P                              # largest |flat pixel shift| of a tap
    EXTW = ((MAXS + 127) // 128) * 128            # zero-extension, lane-aligned width
    inv_n = 1.0 / float(NPIX)

    # Channel-major, lane-dense working layout: (C, B*H*W).  Lane concat at a
    # multiple of 128 (HW = 256), so no masked relayout here.
    x = jnp.concatenate([x_ref[b] for b in range(B)], axis=1)       # (C, NPIX) f32
    zext = jnp.zeros((C, EXTW), jnp.float32)

    def conv(inp, w_ref, b_ref):
        # Zero-extend the flat pixel axis so every tap is a plain static lane slice;
        # the 0/1 boundary mask supplies the "same" zero padding semantics.
        ext = jnp.concatenate([zext, inp, zext], axis=1)            # (C, NPIX + 2*EXTW)
        taps = []
        for kh in range(K):
            for kw in range(K):
                t = kh * K + kw
                s = (kh - P) * W + (kw - P)                         # flat pixel shift
                shifted = ext[:, EXTW + s: EXTW + s + NPIX]         # (C, NPIX)
                taps.append(shifted * mask_ref[t])                  # zero outside image
        # im2col: ONE matmul per conv, contraction K*K*C, bf16 operands, f32 accum.
        patches = jnp.concatenate(taps, axis=0).astype(w_ref.dtype)  # (K*K*C, NPIX)
        acc = jnp.dot(w_ref[...], patches,
                      preferred_element_type=jnp.float32)           # (C, NPIX) f32
        return acc + b_ref[...]                                     # bias (C, 1) bcast

    def batchnorm(a, g_ref, be_ref):
        # Training-mode batch stats over N*H*W, single pass (sum + sum-of-squares),
        # folded into a per-channel scale/shift.
        s = jnp.sum(a, axis=1, keepdims=True)                       # (C, 1)
        s2 = jnp.sum(a * a, axis=1, keepdims=True)                  # (C, 1)
        mean = s * inv_n
        var = s2 * inv_n - mean * mean
        scale = g_ref[...] * jax.lax.rsqrt(var + EPS)
        shift = be_ref[...] - mean * scale
        return a * scale + shift

    y = jnp.maximum(batchnorm(conv(x, w1_ref, b1_ref), g1_ref, be1_ref), 0.0)
    z = batchnorm(conv(y, w2_ref, b2_ref), g2_ref, be2_ref)
    out = z + x                                                     # residual add

    for b in range(B):                                              # lane-dense stores
        out_ref[b] = out[:, b * HW:(b + 1) * HW]


def _boundary_mask(B, H, W, K):
    """0/1 mask[t, 0, p]: tap t applied at flat pixel p stays inside the image."""
    P = K // 2
    p = np.arange(B * H * W)
    h = (p // W) % H
    w = p % W
    rows = []
    for kh in range(K):
        for kw in range(K):
            dh, dw = kh - P, kw - P
            rows.append((h + dh >= 0) & (h + dh < H) & (w + dw >= 0) & (w + dw < W))
    return np.stack(rows).astype(np.float32).reshape(K * K, 1, B * H * W)


@functools.partial(jax.jit, static_argnames=("kernel_size", "matmul_dtype"))
def resblock_pallas(x_nchw, params, kernel_size, matmul_dtype=jnp.bfloat16):
    """x_nchw: (B, C, H, W) f32; params in PyTorch layout.  Returns (B, C, H, W) f32."""
    w1, b1, g1, be1, w2, b2, g2, be2 = params
    B, C, H, W = x_nchw.shape
    K = kernel_size

    # Free reshape only: NCHW is already channel-major.  No transposes, no jnp.pad.
    x_flat = x_nchw.reshape(B, C, H * W)
    mask = jnp.asarray(_boundary_mask(B, H, W, K))

    def wflat(w):   # (Cout, Cin, K, K) -> (Cout, K*K*Cin), tap-major / channel-minor
        return jnp.transpose(w, (0, 2, 3, 1)).reshape(C, K * K * C).astype(matmul_dtype)

    def col(v):     # per-channel params -> (C, 1) for broadcast along the lane axis
        return v.reshape(C, 1).astype(jnp.float32)

    kernel = functools.partial(_resblock_kernel, K, W)
    vmem = pl.BlockSpec(memory_space=pltpu.MemorySpace.VMEM)

    out_flat = pl.pallas_call(
        kernel,
        out_shape=jax.ShapeDtypeStruct((B, C, H * W), jnp.float32),
        in_specs=[vmem] * 10,
        out_specs=vmem,
        compiler_params=pltpu.CompilerParams(vmem_limit_bytes=32 * 1024 * 1024),
    )(x_flat, mask, wflat(w1), col(b1), col(g1), col(be1),
      wflat(w2), col(b2), col(g2), col(be2))

    return out_flat.reshape(B, C, H, W)


def resblock_ref(x, params, kernel_size):
    """Pure-JAX f32 reference matching PyTorch training-mode forward."""
    w1, b1, g1, be1, w2, b2, g2, be2 = params
    P = kernel_size // 2

    def conv(x, w, b):
        y = jax.lax.conv_general_dilated(
            x, w, window_strides=(1, 1), padding=[(P, P), (P, P)],
            dimension_numbers=("NCHW", "OIHW", "NCHW"))
        return y + b.reshape(1, -1, 1, 1)

    def bn(x, g, be):
        mean = x.mean(axis=(0, 2, 3), keepdims=True)
        var = ((x - mean) ** 2).mean(axis=(0, 2, 3), keepdims=True)
        return (x - mean) * jax.lax.rsqrt(var + EPS) * g.reshape(1, -1, 1, 1) \
            + be.reshape(1, -1, 1, 1)

    y = jax.nn.relu(bn(conv(x, w1, b1), g1, be1))
    z = bn(conv(y, w2, b2), g2, be2)
    return z + x


if __name__ == "__main__":
    B, C, H, W = 2, 4, 16, 16
    K = 3

    key = jax.random.PRNGKey(0)
    k1, k2, kx = jax.random.split(key, 3)

    # PyTorch-layout params: conv weight (Cout, Cin, K, K) ~ N(0, 0.02), bias = 0,
    # BatchNorm gamma = 1, beta = 0 (fresh module).
    w1 = jax.random.normal(k1, (C, C, K, K), jnp.float32) * 0.02
    w2 = jax.random.normal(k2, (C, C, K, K), jnp.float32) * 0.02
    b1 = jnp.zeros((C,), jnp.float32)
    b2 = jnp.zeros((C,), jnp.float32)
    g1 = jnp.ones((C,), jnp.float32)
    be1 = jnp.zeros((C,), jnp.float32)
    g2 = jnp.ones((C,), jnp.float32)
    be2 = jnp.zeros((C,), jnp.float32)
    params = (w1, b1, g1, be1, w2, b2, g2, be2)

    x = jax.random.normal(kx, (B, C, H, W), jnp.float32)

    ref = resblock_ref(x, params, K)

    # Structural correctness at full f32 matmul precision.
    out_f32 = jax.block_until_ready(
        resblock_pallas(x, params, K, matmul_dtype=jnp.float32))
    assert out_f32.shape == (B, C, H, W)
    assert jnp.allclose(out_f32, ref, atol=1e-4, rtol=1e-4), \
        f"f32 max abs err {jnp.max(jnp.abs(out_f32 - ref))}"

    # Fast path: bf16 MXU operands with f32 accumulation (BN amplifies the ~1e-3
    # rounding of the conv outputs, so compare with a correspondingly wider tolerance).
    out_bf16 = jax.block_until_ready(
        resblock_pallas(x, params, K, matmul_dtype=jnp.bfloat16))
    assert out_bf16.shape == (B, C, H, W)
    assert jnp.allclose(out_bf16, ref, atol=5e-2, rtol=5e-2), \
        f"bf16 max abs err {jnp.max(jnp.abs(out_bf16 - ref))}"

    print("KERNEL_OK")
</pallas_src>

<mosaic_0001>
module attributes {stable_mosaic.version = 11 : i64} {
  func.func @_resblock_kernel(%arg0: memref<2x4x256xf32, #tpu.memory_space<vmem>>, %arg1: memref<9x1x512xf32, #tpu.memory_space<vmem>>, %arg2: memref<4x36xf32, #tpu.memory_space<vmem>>, %arg3: memref<4x1xf32, #tpu.memory_space<vmem>>, %arg4: memref<4x1xf32, #tpu.memory_space<vmem>>, %arg5: memref<4x1xf32, #tpu.memory_space<vmem>>, %arg6: memref<4x36xf32, #tpu.memory_space<vmem>>, %arg7: memref<4x1xf32, #tpu.memory_space<vmem>>, %arg8: memref<4x1xf32, #tpu.memory_space<vmem>>, %arg9: memref<4x1xf32, #tpu.memory_space<vmem>>, %arg10: memref<2x4x256xf32, #tpu.memory_space<vmem>>) attributes {dimension_semantics = [], scalar_prefetch = 0 : i64, scratch_operands = 0 : i64, tpu.core_type = #tpu.core_type<tc>} {
    %c0 = arith.constant 0 : index
    %c0_0 = arith.constant 0 : index
    %c0_1 = arith.constant 0 : index
    %0 = vector.load %arg0[%c0, %c0_0, %c0_1] : memref<2x4x256xf32, #tpu.memory_space<vmem>>, vector<1x4x256xf32>
    %1 = vector.shape_cast %0 : vector<1x4x256xf32> to vector<4x256xf32>
    %c1 = arith.constant 1 : index
    %c0_2 = arith.constant 0 : index
    %c0_3 = arith.constant 0 : index
    %2 = vector.load %arg0[%c1, %c0_2, %c0_3] : memref<2x4x256xf32, #tpu.memory_space<vmem>>, vector<1x4x256xf32>
    %3 = vector.shape_cast %2 : vector<1x4x256xf32> to vector<4x256xf32>
    %4 = tpu.concatenate %1, %3 in 1 : vector<4x256xf32>, vector<4x256xf32> -> vector<4x512xf32>
    %cst = arith.constant 0.000000e+00 : f32
    %5 = vector.broadcast %cst : f32 to vector<4x128xf32>
    %6 = tpu.concatenate %5, %4, %5 in 1 : vector<4x128xf32>, vector<4x512xf32>, vector<4x128xf32> -> vector<4x768xf32>
    %7 = vector.extract_strided_slice %6 {offsets = [0, 111], sizes = [4, 512], strides = [1, 1]} : vector<4x768xf32> to vector<4x512xf32>
    %c0_4 = arith.constant 0 : index
    %c0_5 = arith.constant 0 : index
    %c0_6 = arith.constant 0 : index
    %8 = vector.load %arg1[%c0_4, %c0_5, %c0_6] : memref<9x1x512xf32, #tpu.memory_space<vmem>>, vector<1x1x512xf32>
    %9 = vector.shape_cast %8 : vector<1x1x512xf32> to vector<1x512xf32>
    %10 = vector.broadcast %9 : vector<1x512xf32> to vector<4x512xf32>
    %11 = arith.mulf %7, %10 : vector<4x512xf32>
    %12 = vector.extract_strided_slice %6 {offsets = [0, 112], sizes = [4, 512], strides = [1, 1]} : vector<4x768xf32> to vector<4x512xf32>
    %c1_7 = arith.constant 1 : index
    %c0_8 = arith.constant 0 : index
    %c0_9 = arith.constant 0 : index
    %13 = vector.load %arg1[%c1_7, %c0_8, %c0_9] : memref<9x1x512xf32, #tpu.memory_space<vmem>>, vector<1x1x512xf32>
    %14 = vector.shape_cast %13 : vector<1x1x512xf32> to vector<1x512xf32>
    %15 = vector.broadcast %14 : vector<1x512xf32> to vector<4x512xf32>
    %16 = arith.mulf %12, %15 : vector<4x512xf32>
    %17 = vector.extract_strided_slice %6 {offsets = [0, 113], sizes = [4, 512], strides = [1, 1]} : vector<4x768xf32> to vector<4x512xf32>
    %c2 = arith.constant 2 : index
    %c0_10 = arith.constant 0 : index
    %c0_11 = arith.constant 0 : index
    %18 = vector.load %arg1[%c2, %c0_10, %c0_11] : memref<9x1x512xf32, #tpu.memory_space<vmem>>, vector<1x1x512xf32>
    %19 = vector.shape_cast %18 : vector<1x1x512xf32> to vector<1x512xf32>
    %20 = vector.broadcast %19 : vector<1x512xf32> to vector<4x512xf32>
    %21 = arith.mulf %17, %20 : vector<4x512xf32>
    %22 = vector.extract_strided_slice %6 {offsets = [0, 127], sizes = [4, 512], strides = [1, 1]} : vector<4x768xf32> to vector<4x512xf32>
    %c3 = arith.constant 3 : index
    %c0_12 = arith.constant 0 : index
    %c0_13 = arith.constant 0 : index
    %23 = vector.load %arg1[%c3, %c0_12, %c0_13] : memref<9x1x512xf32, #tpu.memory_space<vmem>>, vector<1x1x512xf32>
    %24 = vector.shape_cast %23 : vector<1x1x512xf32> to vector<1x512xf32>
    %25 = vector.broadcast %24 : vector<1x512xf32> to vector<4x512xf32>
    %26 = arith.mulf %22, %25 : vector<4x512xf32>
    %27 = vector.extract_strided_slice %6 {offsets = [0, 128], sizes = [4, 512], strides = [1, 1]} : vector<4x768xf32> to vector<4x512xf32>
    %c4 = arith.constant 4 : index
    %c0_14 = arith.constant 0 : index
    %c0_15 = arith.constant 0 : index
    %28 = vector.load %arg1[%c4, %c0_14, %c0_15] : memref<9x1x512xf32, #tpu.memory_space<vmem>>, vector<1x1x512xf32>
    %29 = vector.shape_cast %28 : vector<1x1x512xf32> to vector<1x512xf32>
    %30 = vector.broadcast %29 : vector<1x512xf32> to vector<4x512xf32>
    %31 = arith.mulf %27, %30 : vector<4x512xf32>
    %32 = vector.extract_strided_slice %6 {offsets = [0, 129], sizes = [4, 512], strides = [1, 1]} : vector<4x768xf32> to vector<4x512xf32>
    %c5 = arith.constant 5 : index
    %c0_16 = arith.constant 0 : index
    %c0_17 = arith.constant 0 : index
    %33 = vector.load %arg1[%c5, %c0_16, %c0_17] : memref<9x1x512xf32, #tpu.memory_space<vmem>>, vector<1x1x512xf32>
    %34 = vector.shape_cast %33 : vector<1x1x512xf32> to vector<1x512xf32>
    %35 = vector.broadcast %34 : vector<1x512xf32> to vector<4x512xf32>
    %36 = arith.mulf %32, %35 : vector<4x512xf32>
    %37 = vector.extract_strided_slice %6 {offsets = [0, 143], sizes = [4, 512], strides = [1, 1]} : vector<4x768xf32> to vector<4x512xf32>
    %c6 = arith.constant 6 : index
    %c0_18 = arith.constant 0 : index
    %c0_19 = arith.constant 0 : index
    %38 = vector.load %arg1[%c6, %c0_18, %c0_19] : memref<9x1x512xf32, #tpu.memory_space<vmem>>, vector<1x1x512xf32>
    %39 = vector.shape_cast %38 : vector<1x1x512xf32> to vector<1x512xf32>
    %40 = vector.broadcast %39 : vector<1x512xf32> to vector<4x512xf32>
    %41 = arith.mulf %37, %40 : vector<4x512xf32>
    %42 = vector.extract_strided_slice %6 {offsets = [0, 144], sizes = [4, 512], strides = [1, 1]} : vector<4x768xf32> to vector<4x512xf32>
    %c7 = arith.constant 7 : index
    %c0_20 = arith.constant 0 : index
    %c0_21 = arith.constant 0 : index
    %43 = vector.load %arg1[%c7, %c0_20, %c0_21] : memref<9x1x512xf32, #tpu.memory_space<vmem>>, vector<1x1x512xf32>
    %44 = vector.shape_cast %43 : vector<1x1x512xf32> to vector<1x512xf32>
    %45 = vector.broadcast %44 : vector<1x512xf32> to vector<4x512xf32>
    %46 = arith.mulf %42, %45 : vector<4x512xf32>
    %47 = vector.extract_strided_slice %6 {offsets = [0, 145], sizes = [4, 512], strides = [1, 1]} : vector<4x768xf32> to vector<4x512xf32>
    %c8 = arith.constant 8 : index
    %c0_22 = arith.constant 0 : index
    %c0_23 = arith.constant 0 : index
    %48 = vector.load %arg1[%c8, %c0_22, %c0_23] : memref<9x1x512xf32, #tpu.memory_space<vmem>>, vector<1x1x512xf32>
    %49 = vector.shape_cast %48 : vector<1x1x512xf32> to vector<1x512xf32>
    %50 = vector.broadcast %49 : vector<1x512xf32> to vector<4x512xf32>
    %51 = arith.mulf %47, %50 : vector<4x512xf32>
    %52 = tpu.concatenate %11, %16, %21, %26, %31, %36, %41, %46, %51 in 0 : vector<4x512xf32>, vector<4x512xf32>, vector<4x512xf32>, vector<4x512xf32>, vector<4x512xf32>, vector<4x512xf32>, vector<4x512xf32>, vector<4x512xf32>, vector<4x512xf32> -> vector<36x512xf32>
    %c0_24 = arith.constant 0 : index
    %c0_25 = arith.constant 0 : index
    %53 = vector.load %arg2[%c0_24, %c0_25] : memref<4x36xf32, #tpu.memory_space<vmem>>, vector<4x36xf32>
    %cst_26 = arith.constant dense<0.000000e+00> : vector<4x512xf32>
    %54 = tpu.matmul %53, %52, %cst_26 {dimension_numbers = #tpu.dot_dimension_numbers<[1], [0], [0], [1], [0, 0, 1, 1], [], []>} : vector<4x36xf32>, vector<36x512xf32>, vector<4x512xf32> -> vector<4x512xf32>
    %c0_27 = arith.constant 0 : index
    %c0_28 = arith.constant 0 : index
    %55 = vector.load %arg3[%c0_27, %c0_28] : memref<4x1xf32, #tpu.memory_space<vmem>>, vector<4x1xf32>
    %56 = vector.broadcast %55 : vector<4x1xf32> to vector<4x512xf32>
    %57 = arith.addf %54, %56 : vector<4x512xf32>
    %cst_29 = arith.constant dense<0.000000e+00> : vector<4xf32>
    %58 = vector.multi_reduction <add>, %57, %cst_29 [1] : vector<4x512xf32> to vector<4xf32>
    %59 = vector.shape_cast %58 : vector<4xf32> to vector<4x1xf32>
    %60 = arith.mulf %57, %57 : vector<4x512xf32>
    %cst_30 = arith.constant dense<0.000000e+00> : vector<4xf32>
    %61 = vector.multi_reduction <add>, %60, %cst_30 [1] : vector<4x512xf32> to vector<4xf32>
    %62 = vector.shape_cast %61 : vector<4xf32> to vector<4x1xf32>
    %cst_31 = arith.constant 0.001953125 : f32
    %63 = vector.broadcast %cst_31 : f32 to vector<4x1xf32>
    %64 = arith.mulf %59, %63 : vector<4x1xf32>
    %cst_32 = arith.constant 0.001953125 : f32
    %65 = vector.broadcast %cst_32 : f32 to vector<4x1xf32>
    %66 = arith.mulf %62, %65 : vector<4x1xf32>
    %67 = arith.mulf %64, %64 : vector<4x1xf32>
    %68 = arith.subf %66, %67 : vector<4x1xf32>
    %c0_33 = arith.constant 0 : index
    %c0_34 = arith.constant 0 : index
    %69 = vector.load %arg4[%c0_33, %c0_34] : memref<4x1xf32, #tpu.memory_space<vmem>>, vector<4x1xf32>
    %cst_35 = arith.constant 9.99999974E-6 : f32
    %70 = vector.broadcast %cst_35 : f32 to vector<4x1xf32>
    %71 = arith.addf %68, %70 : vector<4x1xf32>
    %72 = math.rsqrt %71 : vector<4x1xf32>
    %73 = arith.mulf %69, %72 : vector<4x1xf32>
    %c0_36 = arith.constant 0 : index
    %c0_37 = arith.constant 0 : index
    %74 = vector.load %arg5[%c0_36, %c0_37] : memref<4x1xf32, #tpu.memory_space<vmem>>, vector<4x1xf32>
    %75 = arith.mulf %64, %73 : vector<4x1xf32>
    %76 = arith.subf %74, %75 : vector<4x1xf32>
    %77 = vector.broadcast %73 : vector<4x1xf32> to vector<4x512xf32>
    %78 = arith.mulf %57, %77 : vector<4x512xf32>
    %79 = vector.broadcast %76 : vector<4x1xf32> to vector<4x512xf32>
    %80 = arith.addf %78, %79 : vector<4x512xf32>
    %cst_38 = arith.constant 0.000000e+00 : f32
    %81 = vector.broadcast %cst_38 : f32 to vector<4x512xf32>
    %82 = arith.maximumf %80, %81 : vector<4x512xf32>
    %83 = tpu.concatenate %5, %82, %5 in 1 : vector<4x128xf32>, vector<4x512xf32>, vector<4x128xf32> -> vector<4x768xf32>
    %84 = vector.extract_strided_slice %83 {offsets = [0, 111], sizes = [4, 512], strides = [1, 1]} : vector<4x768xf32> to vector<4x512xf32>
    %c0_39 = arith.constant 0 : index
    %c0_40 = arith.constant 0 : index
    %c0_41 = arith.constant 0 : index
    %85 = vector.load %arg1[%c0_39, %c0_40, %c0_41] : memref<9x1x512xf32, #tpu.memory_space<vmem>>, vector<1x1x512xf32>
    %86 = vector.shape_cast %85 : vector<1x1x512xf32> to vector<1x512xf32>
    %87 = vector.broadcast %86 : vector<1x512xf32> to vector<4x512xf32>
    %88 = arith.mulf %84, %87 : vector<4x512xf32>
    %89 = vector.extract_strided_slice %83 {offsets = [0, 112], sizes = [4, 512], strides = [1, 1]} : vector<4x768xf32> to vector<4x512xf32>
    %c1_42 = arith.constant 1 : index
    %c0_43 = arith.constant 0 : index
    %c0_44 = arith.constant 0 : index
    %90 = vector.load %arg1[%c1_42, %c0_43, %c0_44] : memref<9x1x512xf32, #tpu.memory_space<vmem>>, vector<1x1x512xf32>
    %91 = vector.shape_cast %90 : vector<1x1x512xf32> to vector<1x512xf32>
    %92 = vector.broadcast %91 : vector<1x512xf32> to vector<4x512xf32>
    %93 = arith.mulf %89, %92 : vector<4x512xf32>
    %94 = vector.extract_strided_slice %83 {offsets = [0, 113], sizes = [4, 512], strides = [1, 1]} : vector<4x768xf32> to vector<4x512xf32>
    %c2_45 = arith.constant 2 : index
    %c0_46 = arith.constant 0 : index
    %c0_47 = arith.constant 0 : index
    %95 = vector.load %arg1[%c2_45, %c0_46, %c0_47] : memref<9x1x512xf32, #tpu.memory_space<vmem>>, vector<1x1x512xf32>
    %96 = vector.shape_cast %95 : vector<1x1x512xf32> to vector<1x512xf32>
    %97 = vector.broadcast %96 : vector<1x512xf32> to vector<4x512xf32>
    %98 = arith.mulf %94, %97 : vector<4x512xf32>
    %99 = vector.extract_strided_slice %83 {offsets = [0, 127], sizes = [4, 512], strides = [1, 1]} : vector<4x768xf32> to vector<4x512xf32>
    %c3_48 = arith.constant 3 : index
    %c0_49 = arith.constant 0 : index
    %c0_50 = arith.constant 0 : index
    %100 = vector.load %arg1[%c3_48, %c0_49, %c0_50] : memref<9x1x512xf32, #tpu.memory_space<vmem>>, vector<1x1x512xf32>
    %101 = vector.shape_cast %100 : vector<1x1x512xf32> to vector<1x512xf32>
    %102 = vector.broadcast %101 : vector<1x512xf32> to vector<4x512xf32>
    %103 = arith.mulf %99, %102 : vector<4x512xf32>
    %104 = vector.extract_strided_slice %83 {offsets = [0, 128], sizes = [4, 512], strides = [1, 1]} : vector<4x768xf32> to vector<4x512xf32>
    %c4_51 = arith.constant 4 : index
    %c0_52 = arith.constant 0 : index
    %c0_53 = arith.constant 0 : index
    %105 = vector.load %arg1[%c4_51, %c0_52, %c0_53] : memref<9x1x512xf32, #tpu.memory_space<vmem>>, vector<1x1x512xf32>
    %106 = vector.shape_cast %105 : vector<1x1x512xf32> to vector<1x512xf32>
    %107 = vector.broadcast %106 : vector<1x512xf32> to vector<4x512xf32>
    %108 = arith.mulf %104, %107 : vector<4x512xf32>
    %109 = vector.extract_strided_slice %83 {offsets = [0, 129], sizes = [4, 512], strides = [1, 1]} : vector<4x768xf32> to vector<4x512xf32>
    %c5_54 = arith.constant 5 : index
    %c0_55 = arith.constant 0 : index
    %c0_56 = arith.constant 0 : index
    %110 = vector.load %arg1[%c5_54, %c0_55, %c0_56] : memref<9x1x512xf32, #tpu.memory_space<vmem>>, vector<1x1x512xf32>
    %111 = vector.shape_cast %110 : vector<1x1x512xf32> to vector<1x512xf32>
    %112 = vector.broadcast %111 : vector<1x512xf32> to vector<4x512xf32>
    %113 = arith.mulf %109, %112 : vector<4x512xf32>
    %114 = vector.extract_strided_slice %83 {offsets = [0, 143], sizes = [4, 512], strides = [1, 1]} : vector<4x768xf32> to vector<4x512xf32>
    %c6_57 = arith.constant 6 : index
    %c0_58 = arith.constant 0 : index
    %c0_59 = arith.constant 0 : index
    %115 = vector.load %arg1[%c6_57, %c0_58, %c0_59] : memref<9x1x512xf32, #tpu.memory_space<vmem>>, vector<1x1x512xf32>
    %116 = vector.shape_cast %115 : vector<1x1x512xf32> to vector<1x512xf32>
    %117 = vector.broadcast %116 : vector<1x512xf32> to vector<4x512xf32>
    %118 = arith.mulf %114, %117 : vector<4x512xf32>
    %119 = vector.extract_strided_slice %83 {offsets = [0, 144], sizes = [4, 512], strides = [1, 1]} : vector<4x768xf32> to vector<4x512xf32>
    %c7_60 = arith.constant 7 : index
    %c0_61 = arith.constant 0 : index
    %c0_62 = arith.constant 0 : index
    %120 = vector.load %arg1[%c7_60, %c0_61, %c0_62] : memref<9x1x512xf32, #tpu.memory_space<vmem>>, vector<1x1x512xf32>
    %121 = vector.shape_cast %120 : vector<1x1x512xf32> to vector<1x512xf32>
    %122 = vector.broadcast %121 : vector<1x512xf32> to vector<4x512xf32>
    %123 = arith.mulf %119, %122 : vector<4x512xf32>
    %124 = vector.extract_strided_slice %83 {offsets = [0, 145], sizes = [4, 512], strides = [1, 1]} : vector<4x768xf32> to vector<4x512xf32>
    %c8_63 = arith.constant 8 : index
    %c0_64 = arith.constant 0 : index
    %c0_65 = arith.constant 0 : index
    %125 = vector.load %arg1[%c8_63, %c0_64, %c0_65] : memref<9x1x512xf32, #tpu.memory_space<vmem>>, vector<1x1x512xf32>
    %126 = vector.shape_cast %125 : vector<1x1x512xf32> to vector<1x512xf32>
    %127 = vector.broadcast %126 : vector<1x512xf32> to vector<4x512xf32>
    %128 = arith.mulf %124, %127 : vector<4x512xf32>
    %129 = tpu.concatenate %88, %93, %98, %103, %108, %113, %118, %123, %128 in 0 : vector<4x512xf32>, vector<4x512xf32>, vector<4x512xf32>, vector<4x512xf32>, vector<4x512xf32>, vector<4x512xf32>, vector<4x512xf32>, vector<4x512xf32>, vector<4x512xf32> -> vector<36x512xf32>
    %c0_66 = arith.constant 0 : index
    %c0_67 = arith.constant 0 : index
    %130 = vector.load %arg6[%c0_66, %c0_67] : memref<4x36xf32, #tpu.memory_space<vmem>>, vector<4x36xf32>
    %cst_68 = arith.constant dense<0.000000e+00> : vector<4x512xf32>
    %131 = tpu.matmul %130, %129, %cst_68 {dimension_numbers = #tpu.dot_dimension_numbers<[1], [0], [0], [1], [0, 0, 1, 1], [], []>} : vector<4x36xf32>, vector<36x512xf32>, vector<4x512xf32> -> vector<4x512xf32>
    %c0_69 = arith.constant 0 : index
    %c0_70 = arith.constant 0 : index
    %132 = vector.load %arg7[%c0_69, %c0_70] : memref<4x1xf32, #tpu.memory_space<vmem>>, vector<4x1xf32>
    %133 = vector.broadcast %132 : vector<4x1xf32> to vector<4x512xf32>
    %134 = arith.addf %131, %133 : vector<4x512xf32>
    %cst_71 = arith.constant dense<0.000000e+00> : vector<4xf32>
    %135 = vector.multi_reduction <add>, %134, %cst_71 [1] : vector<4x512xf32> to vector<4xf32>
    %136 = vector.shape_cast %135 : vector<4xf32> to vector<4x1xf32>
    %137 = arith.mulf %134, %134 : vector<4x512xf32>
    %cst_72 = arith.constant dense<0.000000e+00> : vector<4xf32>
    %138 = vector.multi_reduction <add>, %137, %cst_72 [1] : vector<4x512xf32> to vector<4xf32>
    %139 = vector.shape_cast %138 : vector<4xf32> to vector<4x1xf32>
    %cst_73 = arith.constant 0.001953125 : f32
    %140 = vector.broadcast %cst_73 : f32 to vector<4x1xf32>
    %141 = arith.mulf %136, %140 : vector<4x1xf32>
    %cst_74 = arith.constant 0.001953125 : f32
    %142 = vector.broadcast %cst_74 : f32 to vector<4x1xf32>
    %143 = arith.mulf %139, %142 : vector<4x1xf32>
    %144 = arith.mulf %141, %141 : vector<4x1xf32>
    %145 = arith.subf %143, %144 : vector<4x1xf32>
    %c0_75 = arith.constant 0 : index
    %c0_76 = arith.constant 0 : index
    %146 = vector.load %arg8[%c0_75, %c0_76] : memref<4x1xf32, #tpu.memory_space<vmem>>, vector<4x1xf32>
    %cst_77 = arith.constant 9.99999974E-6 : f32
    %147 = vector.broadcast %cst_77 : f32 to vector<4x1xf32>
    %148 = arith.addf %145, %147 : vector<4x1xf32>
    %149 = math.rsqrt %148 : vector<4x1xf32>
    %150 = arith.mulf %146, %149 : vector<4x1xf32>
    %c0_78 = arith.constant 0 : index
    %c0_79 = arith.constant 0 : index
    %151 = vector.load %arg9[%c0_78, %c0_79] : memref<4x1xf32, #tpu.memory_space<vmem>>, vector<4x1xf32>
    %152 = arith.mulf %141, %150 : vector<4x1xf32>
    %153 = arith.subf %151, %152 : vector<4x1xf32>
    %154 = vector.broadcast %150 : vector<4x1xf32> to vector<4x512xf32>
    %155 = arith.mulf %134, %154 : vector<4x512xf32>
    %156 = vector.broadcast %153 : vector<4x1xf32> to vector<4x512xf32>
    %157 = arith.addf %155, %156 : vector<4x512xf32>
    %158 = arith.addf %157, %4 : vector<4x512xf32>
    %159 = vector.extract_strided_slice %158 {offsets = [0, 0], sizes = [4, 256], strides = [1, 1]} : vector<4x512xf32> to vector<4x256xf32>
    %c0_80 = arith.constant 0 : index
    %c0_81 = arith.constant 0 : index
    %c0_82 = arith.constant 0 : index
    %160 = vector.load %arg10[%c0_80, %c0_81, %c0_82] : memref<2x4x256xf32, #tpu.memory_space<vmem>>, vector<1x4x256xf32>
    %161 = vector.shape_cast %160 : vector<1x4x256xf32> to vector<4x256xf32>
    %162 = vector.shape_cast %159 : vector<4x256xf32> to vector<1x4x256xf32>
    tpu.vector_store %arg10[%c0_80, %c0_81, %c0_82], %162 {strides = array<i32>} : memref<2x4x256xf32, #tpu.memory_space<vmem>>, vector<1x4x256xf32>,
    %163 = vector.extract_strided_slice %158 {offsets = [0, 256], sizes = [4, 256], strides = [1, 1]} : vector<4x512xf32> to vector<4x256xf32>
    %c1_83 = arith.constant 1 : index
    %c0_84 = arith.constant 0 : index
    %c0_85 = arith.constant 0 : index
    %164 = vector.load %arg10[%c1_83, %c0_84, %c0_85] : memref<2x4x256xf32, #tpu.memory_space<vmem>>, vector<1x4x256xf32>
    %165 = vector.shape_cast %164 : vector<1x4x256xf32> to vector<4x256xf32>
    %166 = vector.shape_cast %163 : vector<4x256xf32> to vector<1x4x256xf32>
    tpu.vector_store %arg10[%c1_83, %c0_84, %c0_85], %166 {strides = array<i32>} : memref<2x4x256xf32, #tpu.memory_space<vmem>>, vector<1x4x256xf32>,
    return
  }
}

</mosaic_0001>

<llo_original>
// kernel: resblock_pallas.1
$region0: #{resblock_pallas.1}
  #allocation0 [shape = 'u32[]', space=smem, size = 0x4, offset = 0x4, fixed_abs, tag = 'smem constant byte address 0x4 - core index']
  #allocation1 [shape = 'u32[72,128]{1,0:T(1,128)}', space=vmem, size = 0x9000, scoped, tag = 'internal scratch']
  %s0 = inlined_call_operand.vmem [shape: f32[2,4,256], index: 0, kind: input, shape index: {}]
  %s1 = inlined_call_operand.vmem [shape: f32[9,1,512], index: 1, kind: input, shape index: {}]
  %s2 = inlined_call_operand.vmem [shape: f32[4,36], index: 2, kind: input, shape index: {}]
  %s3 = inlined_call_operand.vmem [shape: f32[4,1], index: 3, kind: input, shape index: {}]
  %s4 = inlined_call_operand.vmem [shape: f32[4,1], index: 4, kind: input, shape index: {}]
  %s5 = inlined_call_operand.vmem [shape: f32[4,1], index: 5, kind: input, shape index: {}]
  %s6 = inlined_call_operand.vmem [shape: f32[4,36], index: 6, kind: input, shape index: {}]
  %s7 = inlined_call_operand.vmem [shape: f32[4,1], index: 7, kind: input, shape index: {}]
  %s8 = inlined_call_operand.vmem [shape: f32[4,1], index: 8, kind: input, shape index: {}]
  %s9 = inlined_call_operand.vmem [shape: f32[4,1], index: 9, kind: input, shape index: {}]
  %s10 = inlined_call_operand.vmem [shape: f32[2,4,256], index: 10, kind: output, shape index: {}]
  %s11 = sld [smem:[#allocation0]]
  $region50: #{resblock_pallas.1} parent=0
    _
  %s13 = ssub.s32 1, %s11
  %s14 = scalar_select 0, %s13, %s11
  // Predicated region
  $region2: #{resblock_pallas.1} parent=0 // pred_check
    _
  $region3: #{resblock_pallas.1} parent=0 // pred_check_branch
    %16 = sbr.rel (0) target = $region5
  $region4: #{resblock_pallas.1} parent=0 // pred_region
    _
  $region5: #{resblock_pallas.1} parent=0 // pred_fallthru
    _
  // Predicated region
  $region6: #{resblock_pallas.1} parent=0 // pred_check
    _
  $region7: #{resblock_pallas.1} parent=0 // pred_check_branch
    %18 = sbr.rel (0) target = $region9
  $region8: #{resblock_pallas.1} parent=0 // pred_region
    _
  $region9: #{resblock_pallas.1} parent=0 // pred_fallthru
    _
  // Predicated region
  $region10: #{resblock_pallas.1} parent=0 // pred_check
    _
  $region11: #{resblock_pallas.1} parent=0 // pred_check_branch
    %20 = sbr.rel (0) target = $region13
  $region12: #{resblock_pallas.1} parent=0 // pred_region
    _
  $region13: #{resblock_pallas.1} parent=0 // pred_fallthru
    _
  // Predicated region
  $region14: #{resblock_pallas.1} parent=0 // pred_check
    _
  $region15: #{resblock_pallas.1} parent=0 // pred_check_branch
    %22 = sbr.rel (0) target = $region17
  $region16: #{resblock_pallas.1} parent=0 // pred_region
    _
  $region17: #{resblock_pallas.1} parent=0 // pred_fallthru
    _
  // Predicated region
  $region18: #{resblock_pallas.1} parent=0 // pred_check
    _
  $region19: #{resblock_pallas.1} parent=0 // pred_check_branch
    %24 = sbr.rel (0) target = $region21
  $region20: #{resblock_pallas.1} parent=0 // pred_region
    _
  $region21: #{resblock_pallas.1} parent=0 // pred_fallthru
    _
  // Predicated region
  $region22: #{resblock_pallas.1} parent=0 // pred_check
    _
  $region23: #{resblock_pallas.1} parent=0 // pred_check_branch
    %26 = sbr.rel (0) target = $region25
  $region24: #{resblock_pallas.1} parent=0 // pred_region
    _
  $region25: #{resblock_pallas.1} parent=0 // pred_fallthru
    _
  // Predicated region
  $region26: #{resblock_pallas.1} parent=0 // pred_check
    _
  $region27: #{resblock_pallas.1} parent=0 // pred_check_branch
    %28 = sbr.rel (0) target = $region29
  $region28: #{resblock_pallas.1} parent=0 // pred_region
    _
  $region29: #{resblock_pallas.1} parent=0 // pred_fallthru
    _
  // Predicated region
  $region30: #{resblock_pallas.1} parent=0 // pred_check
    _
  $region31: #{resblock_pallas.1} parent=0 // pred_check_branch
    %30 = sbr.rel (0) target = $region33
  $region32: #{resblock_pallas.1} parent=0 // pred_region
    _
  $region33: #{resblock_pallas.1} parent=0 // pred_fallthru
    _
  // Predicated region
  $region34: #{resblock_pallas.1} parent=0 // pred_check
    _
  $region35: #{resblock_pallas.1} parent=0 // pred_check_branch
    %32 = sbr.rel (0) target = $region37
  $region36: #{resblock_pallas.1} parent=0 // pred_region
    _
  $region37: #{resblock_pallas.1} parent=0 // pred_fallthru
    _
  // Predicated region
  $region38: #{resblock_pallas.1} parent=0 // pred_check
    _
  $region39: #{resblock_pallas.1} parent=0 // pred_check_branch
    %34 = sbr.rel (0) target = $region41
  $region40: #{resblock_pallas.1} parent=0 // pred_region
    _
  $region41: #{resblock_pallas.1} parent=0 // pred_fallthru
    _
  %v35 = vld [vmem:[%s0] sm:$0xff]
  %s36 = scalar_lea.vmem %s0, 8
  %v37 = vld [vmem:[%s36] sm:$0xff]
  %39 = vst [vmem:[#allocation1] ss:$2 sm:$0xff] %v35
  %v40 = vld.sshfl [vmem:[#allocation1] sm:$0xff pattern:$0x75316420]
  %v41 = vld.sshfl [vmem:[#allocation1 + $0x8] sm:$0xff pattern:$0x75316420]
  %45 = vst [vmem:[#allocation1] ss:$2 sm:$0xff] %v37
  %v46 = vld.sshfl [vmem:[#allocation1] sm:$0xff pattern:$0x75316420]
  %v47 = vld.sshfl [vmem:[#allocation1 + $0x8] sm:$0xff pattern:$0x75316420]
  %v50 = vld [vmem:[%s1] sm:$0xf]
  %v52 = vperm.slane %v50, 0
  %v53 = vperm.slane %v50, 1
  %v54 = vperm.slane %v50, 2
  %v55 = vperm.slane %v50, 3
  %56 = vrot.lane.b32.xlu0 %v52, 111
  %v57 = vpop.permute.xlu0 %56
  %58 = vrot.lane.b32.xlu0 %v53, 111
  %v59 = vpop.permute.xlu0 %58
  %60 = vrot.lane.b32.xlu0 %v54, 111
  %v61 = vpop.permute.xlu0 %60
  %62 = vrot.lane.b32.xlu0 %v55, 111
  %v63 = vpop.permute.xlu0 %62
  %vm64 = vcmask 908288
  %v65 = vsel %vm64, %v57, %v59
  %v66 = vsel %vm64, %v59, %v61
  %v67 = vsel %vm64, %v61, %v63
  %v73 = vmul.f32 %v57, 0.0
  %v74 = vmul.f32 %v40, %v65
  %v75 = vmul.f32 %v41, %v66
  %v76 = vmul.f32 %v46, %v67
  %v77 = vmul.f32 %v47, %v63
  %s78 = scalar_lea.vmem %s1, 4
  %v79 = vld [vmem:[%s78] sm:$0xf]
  %v81 = vperm.slane %v79, 0
  %v82 = vperm.slane %v79, 1
  %v83 = vperm.slane %v79, 2
  %v84 = vperm.slane %v79, 3
  %85 = vrot.lane.b32.xlu0 %v81, 112
  %v86 = vpop.permute.xlu0 %85
  %87 = vrot.lane.b32.xlu0 %v82, 112
  %v88 = vpop.permute.xlu0 %87
  %89 = vrot.lane.b32.xlu0 %v83, 112
  %v90 = vpop.permute.xlu0 %89
  %91 = vrot.lane.b32.xlu0 %v84, 112
  %v92 = vpop.permute.xlu0 %91
  %vm93 = vcmask 916480
  %v94 = vsel %vm93, %v86, %v88
  %v95 = vsel %vm93, %v88, %v90
  %v96 = vsel %vm93, %v90, %v92
  %v102 = vmul.f32 %v86, 0.0
  %v103 = vmul.f32 %v40, %v94
  %v104 = vmul.f32 %v41, %v95
  %v105 = vmul.f32 %v46, %v96
  %v106 = vmul.f32 %v47, %v92
  %s107 = scalar_lea.vmem %s1, 8
  %v108 = vld [vmem:[%s107] sm:$0xf]
  %v110 = vperm.slane %v108, 0
  %v111 = vperm.slane %v108, 1
  %v112 = vperm.slane %v108, 2
  %v113 = vperm.slane %v108, 3
  %114 = vrot.lane.b32.xlu0 %v110, 113
  %v115 = vpop.permute.xlu0 %114
  %116 = vrot.lane.b32.xlu0 %v111, 113
  %v117 = vpop.permute.xlu0 %116
  %118 = vrot.lane.b32.xlu0 %v112, 113
  %v119 = vpop.permute.xlu0 %118
  %120 = vrot.lane.b32.xlu0 %v113, 113
  %v121 = vpop.permute.xlu0 %120
  %vm122 = vcmask 924672
  %v123 = vsel %vm122, %v115, %v117
  %v124 = vsel %vm122, %v117, %v119
  %v125 = vsel %vm122, %v119, %v121
  %v131 = vmul.f32 %v115, 0.0
  %v132 = vmul.f32 %v40, %v123
  %v133 = vmul.f32 %v41, %v124
  %v134 = vmul.f32 %v46, %v125
  %v135 = vmul.f32 %v47, %v121
  %s136 = scalar_lea.vmem %s1, 12
  %v137 = vld [vmem:[%s136] sm:$0xf]
  %v139 = vperm.slane %v137, 0
  %v140 = vperm.slane %v137, 1
  %v141 = vperm.slane %v137, 2
  %v142 = vperm.slane %v137, 3
  %143 = vrot.lane.b32.xlu0 %v139, 127
  %v144 = vpop.permute.xlu0 %143
  %145 = vrot.lane.b32.xlu0 %v140, 127
  %v146 = vpop.permute.xlu0 %145
  %147 = vrot.lane.b32.xlu0 %v141, 127
  %v148 = vpop.permute.xlu0 %147
  %149 = vrot.lane.b32.xlu0 %v142, 127
  %v150 = vpop.permute.xlu0 %149
  %vm151 = vcmask 1039360
  %v152 = vsel %vm151, %v144, %v146
  %v153 = vsel %vm151, %v146, %v148
  %v154 = vsel %vm151, %v148, %v150
  %v160 = vmul.f32 %v144, 0.0
  %v161 = vmul.f32 %v40, %v152
  %v162 = vmul.f32 %v41, %v153
  %v163 = vmul.f32 %v46, %v154
  %v164 = vmul.f32 %v47, %v150
  %s165 = scalar_lea.vmem %s1, 16
  %v166 = vld [vmem:[%s165] sm:$0xf]
  %v168 = vperm.slane %v166, 0
  %v169 = vperm.slane %v166, 1
  %v170 = vperm.slane %v166, 2
  %v171 = vperm.slane %v166, 3
  %v176 = vmul.f32 %v40, %v168
  %v177 = vmul.f32 %v41, %v169
  %v178 = vmul.f32 %v46, %v170
  %v179 = vmul.f32 %v47, %v171
  %s180 = scalar_lea.vmem %s1, 20
  %v181 = vld [vmem:[%s180] sm:$0xf]
  %v183 = vperm.slane %v181, 0
  %v184 = vperm.slane %v181, 1
  %v185 = vperm.slane %v181, 2
  %v186 = vperm.slane %v181, 3
  %187 = vrot.lane.b32.xlu0 %v183, 1
  %v188 = vpop.permute.xlu0 %187
  %189 = vrot.lane.b32.xlu0 %v184, 1
  %v190 = vpop.permute.xlu0 %189
  %191 = vrot.lane.b32.xlu0 %v185, 1
  %v192 = vpop.permute.xlu0 %191
  %193 = vrot.lane.b32.xlu0 %v186, 1
  %v194 = vpop.permute.xlu0 %193
  %vm195 = vcmask 7168
  %v196 = vsel %vm195, %v188, %v190
  %v197 = vsel %vm195, %v190, %v192
  %v198 = vsel %vm195, %v192, %v194
  %v204 = vmul.f32 %v40, %v188
  %v205 = vmul.f32 %v41, %v196
  %v206 = vmul.f32 %v46, %v197
  %v207 = vmul.f32 %v47, %v198
  %v208 = vmul.f32 %v194, 0.0
  %s209 = scalar_lea.vmem %s1, 24
  %v210 = vld [vmem:[%s209] sm:$0xf]
  %v212 = vperm.slane %v210, 0
  %v213 = vperm.slane %v210, 1
  %v214 = vperm.slane %v210, 2
  %v215 = vperm.slane %v210, 3
  %216 = vrot.lane.b32.xlu0 %v212, 15
  %v217 = vpop.permute.xlu0 %216
  %218 = vrot.lane.b32.xlu0 %v213, 15
  %v219 = vpop.permute.xlu0 %218
  %220 = vrot.lane.b32.xlu0 %v214, 15
  %v221 = vpop.permute.xlu0 %220
  %222 = vrot.lane.b32.xlu0 %v215, 15
  %v223 = vpop.permute.xlu0 %222
  %vm224 = vcmask 121856
  %v225 = vsel %vm224, %v217, %v219
  %v226 = vsel %vm224, %v219, %v221
  %v227 = vsel %vm224, %v221, %v223
  %v233 = vmul.f32 %v40, %v217
  %v234 = vmul.f32 %v41, %v225
  %v235 = vmul.f32 %v46, %v226
  %v236 = vmul.f32 %v47, %v227
  %v237 = vmul.f32 %v223, 0.0
  %s238 = scalar_lea.vmem %s1, 28
  %v239 = vld [vmem:[%s238] sm:$0xf]
  %v241 = vperm.slane %v239, 0
  %v242 = vperm.slane %v239, 1
  %v243 = vperm.slane %v239, 2
  %v244 = vperm.slane %v239, 3
  %245 = vrot.lane.b32.xlu0 %v241, 16
  %v246 = vpop.permute.xlu0 %245
  %247 = vrot.lane.b32.xlu0 %v242, 16
  %v248 = vpop.permute.xlu0 %247
  %249 = vrot.lane.b32.xlu0 %v243, 16
  %v250 = vpop.permute.xlu0 %249
  %251 = vrot.lane.b32.xlu0 %v244, 16
  %v252 = vpop.permute.xlu0 %251
  %vm253 = vcmask 130048
  %v254 = vsel %vm253, %v246, %v248
  %v255 = vsel %vm253, %v248, %v250
  %v256 = vsel %vm253, %v250, %v252
  %v262 = vmul.f32 %v40, %v246
  %v263 = vmul.f32 %v41, %v254
  %v264 = vmul.f32 %v46, %v255
  %v265 = vmul.f32 %v47, %v256
  %v266 = vmul.f32 %v252, 0.0
  %s267 = scalar_lea.vmem %s1, 32
  %v268 = vld [vmem:[%s267] sm:$0xf]
  %v270 = vperm.slane %v268, 0
  %v271 = vperm.slane %v268, 1
  %v272 = vperm.slane %v268, 2
  %v273 = vperm.slane %v268, 3
  %274 = vrot.lane.b32.xlu0 %v270, 17
  %v275 = vpop.permute.xlu0 %274
  %276 = vrot.lane.b32.xlu0 %v271, 17
  %v277 = vpop.permute.xlu0 %276
  %278 = vrot.lane.b32.xlu0 %v272, 17
  %v279 = vpop.permute.xlu0 %278
  %280 = vrot.lane.b32.xlu0 %v273, 17
  %v281 = vpop.permute.xlu0 %280
  %vm282 = vcmask 138240
  %v283 = vsel %vm282, %v275, %v277
  %v284 = vsel %vm282, %v277, %v279
  %v285 = vsel %vm282, %v279, %v281
  %v291 = vmul.f32 %v40, %v275
  %v292 = vmul.f32 %v41, %v283
  %v293 = vmul.f32 %v46, %v284
  %v294 = vmul.f32 %v47, %v285
  %v295 = vmul.f32 %v281, 0.0
  %v301 = vrot.slane %v102, 4
  %v302 = vrot.slane %v103, 4
  %v303 = vrot.slane %v104, 4
  %v304 = vrot.slane %v105, 4
  %v305 = vrot.slane %v106, 4
  %306 = vrot.lane.b32.xlu0 %v301, 127
  %v307 = vpop.permute.xlu0 %306
  %308 = vrot.lane.b32.xlu0 %v302, 127
  %v309 = vpop.permute.xlu0 %308
  %310 = vrot.lane.b32.xlu0 %v303, 127
  %v311 = vpop.permute.xlu0 %310
  %312 = vrot.lane.b32.xlu0 %v304, 127
  %v313 = vpop.permute.xlu0 %312
  %314 = vrot.lane.b32.xlu0 %v305, 127
  %v315 = vpop.permute.xlu0 %314
  %v316 = vsel %vm151, %v307, %v309
  %v317 = vsel %vm151, %v309, %v311
  %v318 = vsel %vm151, %v311, %v313
  %v319 = vsel %vm151, %v313, %v315
  %330 = vrot.lane.b32.xlu0 %v131, 126
  %v331 = vpop.permute.xlu0 %330
  %332 = vrot.lane.b32.xlu0 %v132, 126
  %v333 = vpop.permute.xlu0 %332
  %334 = vrot.lane.b32.xlu0 %v133, 126
  %v335 = vpop.permute.xlu0 %334
  %336 = vrot.lane.b32.xlu0 %v134, 126
  %v337 = vpop.permute.xlu0 %336
  %338 = vrot.lane.b32.xlu0 %v135, 126
  %v339 = vpop.permute.xlu0 %338
  %vm340 = vcmask 1031168
  %v341 = vsel %vm340, %v331, %v333
  %v342 = vsel %vm340, %v333, %v335
  %v343 = vsel %vm340, %v335, %v337
  %v344 = vsel %vm340, %v337, %v339
  %v355 = vrot.slane %v160, 4
  %v356 = vrot.slane %v161, 4
  %v357 = vrot.slane %v162, 4
  %v358 = vrot.slane %v163, 4
  %v359 = vrot.slane %v164, 4
  %360 = vrot.lane.b32.xlu0 %v355, 112
  %v361 = vpop.permute.xlu0 %360
  %362 = vrot.lane.b32.xlu0 %v356, 112
  %v363 = vpop.permute.xlu0 %362
  %364 = vrot.lane.b32.xlu0 %v357, 112
  %v365 = vpop.permute.xlu0 %364
  %366 = vrot.lane.b32.xlu0 %v358, 112
  %v367 = vpop.permute.xlu0 %366
  %368 = vrot.lane.b32.xlu0 %v359, 112
  %v369 = vpop.permute.xlu0 %368
  %v370 = vsel %vm93, %v361, %v363
  %v371 = vsel %vm93, %v363, %v365
  %v372 = vsel %vm93, %v365, %v367
  %v373 = vsel %vm93, %v367, %v369
  %383 = vrot.lane.b32.xlu0 %v176, 111
  %v384 = vpop.permute.xlu0 %383
  %385 = vrot.lane.b32.xlu0 %v177, 111
  %v386 = vpop.permute.xlu0 %385
  %387 = vrot.lane.b32.xlu0 %v178, 111
  %v388 = vpop.permute.xlu0 %387
  %389 = vrot.lane.b32.xlu0 %v179, 111
  %v390 = vpop.permute.xlu0 %389
  %v391 = vsel %vm64, %v384, %v386
  %v392 = vsel %vm64, %v386, %v388
  %v393 = vsel %vm64, %v388, %v390
  %v404 = vrot.slane %v204, 4
  %v405 = vrot.slane %v205, 4
  %v406 = vrot.slane %v206, 4
  %v407 = vrot.slane %v207, 4
  %v408 = vrot.slane %v208, 4
  %409 = vrot.lane.b32.xlu0 %v404, 110
  %v410 = vpop.permute.xlu0 %409
  %411 = vrot.lane.b32.xlu0 %v405, 110
  %v412 = vpop.permute.xlu0 %411
  %413 = vrot.lane.b32.xlu0 %v406, 110
  %v414 = vpop.permute.xlu0 %413
  %415 = vrot.lane.b32.xlu0 %v407, 110
  %v416 = vpop.permute.xlu0 %415
  %417 = vrot.lane.b32.xlu0 %v408, 110
  %v418 = vpop.permute.xlu0 %417
  %vm419 = vcmask 900096
  %v420 = vsel %vm419, %v410, %v412
  %v421 = vsel %vm419, %v412, %v414
  %v422 = vsel %vm419, %v414, %v416
  %v423 = vsel %vm419, %v416, %v418
  %434 = vrot.lane.b32.xlu0 %v233, 96
  %v435 = vpop.permute.xlu0 %434
  %436 = vrot.lane.b32.xlu0 %v234, 96
  %v437 = vpop.permute.xlu0 %436
  %438 = vrot.lane.b32.xlu0 %v235, 96
  %v439 = vpop.permute.xlu0 %438
  %440 = vrot.lane.b32.xlu0 %v236, 96
  %v441 = vpop.permute.xlu0 %440
  %442 = vrot.lane.b32.xlu0 %v237, 96
  %v443 = vpop.permute.xlu0 %442
  %vm444 = vcmask 785408
  %v445 = vsel %vm444, %v435, %v437
  %v446 = vsel %vm444, %v437, %v439
  %v447 = vsel %vm444, %v439, %v441
  %v448 = vsel %vm444, %v441, %v443
  %v459 = vrot.slane %v262, 4
  %v460 = vrot.slane %v263, 4
  %v461 = vrot.slane %v264, 4
  %v462 = vrot.slane %v265, 4
  %v463 = vrot.slane %v266, 4
  %464 = vrot.lane.b32.xlu0 %v459, 95
  %v465 = vpop.permute.xlu0 %464
  %466 = vrot.lane.b32.xlu0 %v460, 95
  %v467 = vpop.permute.xlu0 %466
  %468 = vrot.lane.b32.xlu0 %v461, 95
  %v469 = vpop.permute.xlu0 %468
  %470 = vrot.lane.b32.xlu0 %v462, 95
  %v471 = vpop.permute.xlu0 %470
  %472 = vrot.lane.b32.xlu0 %v463, 95
  %v473 = vpop.permute.xlu0 %472
  %vm474 = vcmask 777216
  %v475 = vsel %vm474, %v465, %v467
  %v476 = vsel %vm474, %v467, %v469
  %v477 = vsel %vm474, %v469, %v471
  %v478 = vsel %vm474, %v471, %v473
  %489 = vrot.lane.b32.xlu0 %v291, 94
  %v490 = vpop.permute.xlu0 %489
  %491 = vrot.lane.b32.xlu0 %v292, 94
  %v492 = vpop.permute.xlu0 %491
  %493 = vrot.lane.b32.xlu0 %v293, 94
  %v494 = vpop.permute.xlu0 %493
  %495 = vrot.lane.b32.xlu0 %v294, 94
  %v496 = vpop.permute.xlu0 %495
  %497 = vrot.lane.b32.xlu0 %v295, 94
  %v498 = vpop.permute.xlu0 %497
  %vm499 = vcmask 769024
  %v500 = vsel %vm499, %v490, %v492
  %v501 = vsel %vm499, %v492, %v494
  %v502 = vsel %vm499, %v494, %v496
  %v503 = vsel %vm499, %v496, %v498
  %vm504 = vcmask 1043456
  %v505 = vsel %vm504, %v73, %v316
  %v506 = vsel %vm504, %v74, %v317
  %v507 = vsel %vm504, %v75, %v318
  %v508 = vsel %vm504, %v76, %v319
  %v509 = vsel %vm504, %v77, %v315
  %v510 = vsel %vm504, %v341, %v370
  %v511 = vsel %vm504, %v342, %v371
  %v512 = vsel %vm504, %v343, %v372
  %v513 = vsel %vm504, %v344, %v373
  %v514 = vsel %vm504, %v339, %v369
  %v515 = vsel %vm504, %v384, %v410
  %v516 = vsel %vm504, %v391, %v420
  %v517 = vsel %vm504, %v392, %v421
  %v518 = vsel %vm504, %v393, %v422
  %v519 = vsel %vm504, %v390, %v423
  %v520 = vsel %vm504, %v435, %v465
  %v521 = vsel %vm504, %v445, %v475
  %v522 = vsel %vm504, %v446, %v476
  %v523 = vsel %vm504, %v447, %v477
  %v524 = vsel %vm504, %v448, %v478
  %v525 = vld [vmem:[%s2] sm:$0xf]
  %v526 = vld [vmem:[%s3] sm:$0xf]
  %528 = vset.pattern.permute.xlu0 0
  %529 = vperm.xlu0 %528, %v526
  %v530 = vpop.permute.xlu0 %529
  %552 = vrot.lane.b32.xlu0 %v505, 17
  %v553 = vpop.permute.xlu0 %552
  %554 = vrot.lane.b32.xlu0 %v506, 17
  %v555 = vpop.permute.xlu0 %554
  %556 = vrot.lane.b32.xlu0 %v507, 17
  %v557 = vpop.permute.xlu0 %556
  %558 = vrot.lane.b32.xlu0 %v508, 17
  %v559 = vpop.permute.xlu0 %558
  %560 = vrot.lane.b32.xlu0 %v509, 17
  %v561 = vpop.permute.xlu0 %560
  %562 = vrot.lane.b32.xlu0 %v510, 17
  %v563 = vpop.permute.xlu0 %562
  %564 = vrot.lane.b32.xlu0 %v511, 17
  %v565 = vpop.permute.xlu0 %564
  %566 = vrot.lane.b32.xlu0 %v512, 17
  %v567 = vpop.permute.xlu0 %566
  %568 = vrot.lane.b32.xlu0 %v513, 17
  %v569 = vpop.permute.xlu0 %568
  %570 = vrot.lane.b32.xlu0 %v514, 17
  %v571 = vpop.permute.xlu0 %570
  %572 = vrot.lane.b32.xlu0 %v515, 17
  %v573 = vpop.permute.xlu0 %572
  %574 = vrot.lane.b32.xlu0 %v516, 17
  %v575 = vpop.permute.xlu0 %574
  %576 = vrot.lane.b32.xlu0 %v517, 17
  %v577 = vpop.permute.xlu0 %576
  %578 = vrot.lane.b32.xlu0 %v518, 17
  %v579 = vpop.permute.xlu0 %578
  %580 = vrot.lane.b32.xlu0 %v519, 17
  %v581 = vpop.permute.xlu0 %580
  %582 = vrot.lane.b32.xlu0 %v520, 17
  %v583 = vpop.permute.xlu0 %582
  %584 = vrot.lane.b32.xlu0 %v521, 17
  %v585 = vpop.permute.xlu0 %584
  %586 = vrot.lane.b32.xlu0 %v522, 17
  %v587 = vpop.permute.xlu0 %586
  %588 = vrot.lane.b32.xlu0 %v523, 17
  %v589 = vpop.permute.xlu0 %588
  %590 = vrot.lane.b32.xlu0 %v524, 17
  %v591 = vpop.permute.xlu0 %590
  %592 = vrot.lane.b32.xlu0 %v490, 17
  %v593 = vpop.permute.xlu0 %592
  %594 = vrot.lane.b32.xlu0 %v500, 17
  %v595 = vpop.permute.xlu0 %594
  %596 = vrot.lane.b32.xlu0 %v501, 17
  %v597 = vpop.permute.xlu0 %596
  %598 = vrot.lane.b32.xlu0 %v502, 17
  %v599 = vpop.permute.xlu0 %598
  %600 = vrot.lane.b32.xlu0 %v503, 17
  %v601 = vpop.permute.xlu0 %600
  %v602 = vsel %vm282, %v553, %v555
  %v603 = vsel %vm282, %v555, %v557
  %v604 = vsel %vm282, %v557, %v559
  %v605 = vsel %vm282, %v559, %v561
  %v606 = vsel %vm282, %v563, %v565
  %v607 = vsel %vm282, %v565, %v567
  %v608 = vsel %vm282, %v567, %v569
  %v609 = vsel %vm282, %v569, %v571
  %v610 = vsel %vm282, %v573, %v575
  %v611 = vsel %vm282, %v575, %v577
  %v612 = vsel %vm282, %v577, %v579
  %v613 = vsel %vm282, %v579, %v581
  %v614 = vsel %vm282, %v583, %v585
  %v615 = vsel %vm282, %v585, %v587
  %v616 = vsel %vm282, %v587, %v589
  %v617 = vsel %vm282, %v589, %v591
  %v618 = vsel %vm282, %v593, %v595
  %v619 = vsel %vm282, %v595, %v597
  %v620 = vsel %vm282, %v597, %v599
  %v621 = vsel %vm282, %v599, %v601
  %vm638 = vcmask 293888
  %v640 = vsel %vm638, %v525, 0
  %v642 = vsel %vm504, %v618, 0
  %v644 = vsel %vm504, %v619, 0
  %v646 = vsel %vm504, %v620, 0
  %v648 = vsel %vm504, %v621, 0
  %650 = vmatpush.msra.mxu0 0.0
  %651 = vmatpush.msra.mxu0 0.0
  %652 = vmatpush.msra.mxu0 0.0
  %653 = vmatpush.msra.mxu0 0.0
  %654 = vmatpush.msra.mxu0 0.0
  %655 = vmatpush.msra.mxu0 0.0
  %656 = vmatpush.msra.mxu0 0.0
  %657 = vmatpush.msra.mxu0 0.0
  %658 = vmatpush.msra.mxu0 0.0
  %659 = vmatpush.msra.mxu0 0.0
  %660 = vmatpush.msra.mxu0 0.0
  %661 = vmatpush.msra.mxu0 %v642
  %662 = vmatpush.msra.mxu0 %v614
  %663 = vmatpush.msra.mxu0 %v610
  %664 = vmatpush.msra.mxu0 %v606
  %665 = vmatpush.msra.mxu0 %v602
  %666 = vmatmul.f32.gmra.mxu0 %v640
  %v667 = vpop.f32.mrf.mxu0
  %v668 = vadd.f32 %v530, %v667
  %669 = vdwg.mxu0
  %670 = vmatpush.msra.mxu0 0.0
  %671 = vmatpush.msra.mxu0 0.0
  %672 = vmatpush.msra.mxu0 0.0
  %673 = vmatpush.msra.mxu0 0.0
  %674 = vmatpush.msra.mxu0 0.0
  %675 = vmatpush.msra.mxu0 0.0
  %676 = vmatpush.msra.mxu0 0.0
  %677 = vmatpush.msra.mxu0 0.0
  %678 = vmatpush.msra.mxu0 0.0
  %679 = vmatpush.msra.mxu0 0.0
  %680 = vmatpush.msra.mxu0 0.0
  %681 = vmatpush.msra.mxu0 %v644
  %682 = vmatpush.msra.mxu0 %v615
  %683 = vmatpush.msra.mxu0 %v611
  %684 = vmatpush.msra.mxu0 %v607
  %685 = vmatpush.msra.mxu0 %v603
  %686 = vmatmul.f32.gmra.mxu0 %v640
  %v687 = vpop.f32.mrf.mxu0
  %v688 = vadd.f32 %v530, %v687
  %689 = vdwg.mxu0
  %690 = vmatpush.msra.mxu0 0.0
  %691 = vmatpush.msra.mxu0 0.0
  %692 = vmatpush.msra.mxu0 0.0
  %693 = vmatpush.msra.mxu0 0.0
  %694 = vmatpush.msra.mxu0 0.0
  %695 = vmatpush.msra.mxu0 0.0
  %696 = vmatpush.msra.mxu0 0.0
  %697 = vmatpush.msra.mxu0 0.0
  %698 = vmatpush.msra.mxu0 0.0
  %699 = vmatpush.msra.mxu0 0.0
  %700 = vmatpush.msra.mxu0 0.0
  %701 = vmatpush.msra.mxu0 %v646
  %702 = vmatpush.msra.mxu0 %v616
  %703 = vmatpush.msra.mxu0 %v612
  %704 = vmatpush.msra.mxu0 %v608
  %705 = vmatpush.msra.mxu0 %v604
  %706 = vmatmul.f32.gmra.mxu0 %v640
  %v707 = vpop.f32.mrf.mxu0
  %v708 = vadd.f32 %v530, %v707
  %709 = vdwg.mxu0
  %710 = vmatpush.msra.mxu0 0.0
  %711 = vmatpush.msra.mxu0 0.0
  %712 = vmatpush.msra.mxu0 0.0
  %713 = vmatpush.msra.mxu0 0.0
  %714 = vmatpush.msra.mxu0 0.0
  %715 = vmatpush.msra.mxu0 0.0
  %716 = vmatpush.msra.mxu0 0.0
  %717 = vmatpush.msra.mxu0 0.0
  %718 = vmatpush.msra.mxu0 0.0
  %719 = vmatpush.msra.mxu0 0.0
  %720 = vmatpush.msra.mxu0 0.0
  %721 = vmatpush.msra.mxu0 %v648
  %722 = vmatpush.msra.mxu0 %v617
  %723 = vmatpush.msra.mxu0 %v613
  %724 = vmatpush.msra.mxu0 %v609
  %725 = vmatpush.msra.mxu0 %v605
  %726 = vmatmul.f32.gmra.mxu0 %v640
  %v727 = vpop.f32.mrf.mxu0
  %v728 = vadd.f32 %v530, %v727
  %729 = vdwg.mxu0
  %v730 = vsel %vm504, %v668, 0.0
  %v731 = vsel %vm504, %v688, 0.0
  %v732 = vadd.f32 %v730, %v731
  %v733 = vsel %vm504, %v708, 0.0
  %v734 = vadd.f32 %v732, %v733
  %v735 = vsel %vm504, %v728, 0.0
  %v736 = vadd.f32 %v734, %v735
  %737 = vadd.xlane.f32.xlu0 %v736
  %v738 = vpop.xlane.xlu0 %737
  %v739 = vmul.f32 %v668, %v668
  %v740 = vmul.f32 %v688, %v688
  %v741 = vmul.f32 %v708, %v708
  %v742 = vmul.f32 %v728, %v728
  %v743 = vsel %vm504, %v739, 0.0
  %v744 = vsel %vm504, %v740, 0.0
  %v745 = vadd.f32 %v743, %v744
  %v746 = vsel %vm504, %v741, 0.0
  %v747 = vadd.f32 %v745, %v746
  %v748 = vsel %vm504, %v742, 0.0
  %v749 = vadd.f32 %v747, %v748
  %750 = vadd.xlane.f32.xlu0 %v749
  %v751 = vpop.xlane.xlu0 %750
  %v752 = vmul.f32 %v738, 0.001953125
  %v753 = vmul.f32 %v751, 0.001953125
  %v754 = vmul.f32 %v752, %v752
  %v755 = vsub.f32 %v753, %v754
  %v756 = vld [vmem:[%s4] sm:$0xf]
  %v757 = vadd.f32 %v755, 1e-05
  %v758 = vrsqrt.pop %v757
  %v759 = vmul.f32 %v758, %v757
  %v760 = vmul.f32 %v759, %v758
  %v761 = vmul.f32 0.5, %v760
  %v762 = vsub.f32 1.5, %v761
  %v763 = vmul.f32 %v758, %v762
  %vm764 = vweird.f32 %v757
  %vm765 = vweird.f32 %v758
  %vm766 = vmor %vm764, %vm765
  %v767 = vsel %vm766, %v758, %v763
  %v768 = vmul.f32 %v756, %v767
  %v769 = vld [vmem:[%s5] sm:$0xf]
  %v770 = vmul.f32 %v752, %v768
  %v771 = vsub.f32 %v769, %v770
  %773 = vset.pattern.permute.xlu0 0
  %774 = vperm.xlu0 %773, %v768
  %v775 = vpop.permute.xlu0 %774
  %v777 = vmul.f32 %v668, %v775
  %v778 = vmul.f32 %v688, %v775
  %v779 = vmul.f32 %v708, %v775
  %v780 = vmul.f32 %v728, %v775
  %782 = vset.pattern.permute.xlu0 0
  %783 = vperm.xlu0 %782, %v771
  %v784 = vpop.permute.xlu0 %783
  %v786 = vadd.f32 %v777, %v784
  %v787 = vadd.f32 %v778, %v784
  %v788 = vadd.f32 %v779, %v784
  %v789 = vadd.f32 %v780, %v784
  %v790 = vmax.f32 %v786, 0.0
  %v791 = vmax.f32 %v787, 0.0
  %v792 = vmax.f32 %v788, 0.0
  %v793 = vmax.f32 %v789, 0.0
  %v794 = vmul.f32 %v790, %v65
  %v795 = vmul.f32 %v791, %v66
  %v796 = vmul.f32 %v792, %v67
  %v797 = vmul.f32 %v793, %v63
  %v798 = vmul.f32 %v790, %v94
  %v799 = vmul.f32 %v791, %v95
  %v800 = vmul.f32 %v792, %v96
  %v801 = vmul.f32 %v793, %v92
  %v802 = vmul.f32 %v790, %v123
  %v803 = vmul.f32 %v791, %v124
  %v804 = vmul.f32 %v792, %v125
  %v805 = vmul.f32 %v793, %v121
  %v806 = vmul.f32 %v790, %v152
  %v807 = vmul.f32 %v791, %v153
  %v808 = vmul.f32 %v792, %v154
  %v809 = vmul.f32 %v793, %v150
  %v810 = vmul.f32 %v790, %v168
  %v811 = vmul.f32 %v791, %v169
  %v812 = vmul.f32 %v792, %v170
  %v813 = vmul.f32 %v793, %v171
  %v814 = vmul.f32 %v790, %v188
  %v815 = vmul.f32 %v791, %v196
  %v816 = vmul.f32 %v792, %v197
  %v817 = vmul.f32 %v793, %v198
  %v818 = vmul.f32 %v790, %v217
  %v819 = vmul.f32 %v791, %v225
  %v820 = vmul.f32 %v792, %v226
  %v821 = vmul.f32 %v793, %v227
  %v822 = vmul.f32 %v790, %v246
  %v823 = vmul.f32 %v791, %v254
  %v824 = vmul.f32 %v792, %v255
  %v825 = vmul.f32 %v793, %v256
  %v826 = vmul.f32 %v790, %v275
  %v827 = vmul.f32 %v791, %v283
  %v828 = vmul.f32 %v792, %v284
  %v829 = vmul.f32 %v793, %v285
  %v834 = vrot.slane %v798, 4
  %v835 = vrot.slane %v799, 4
  %v836 = vrot.slane %v800, 4
  %v837 = vrot.slane %v801, 4
  %838 = vrot.lane.b32.xlu0 %v834, 127
  %v839 = vpop.permute.xlu0 %838
  %840 = vrot.lane.b32.xlu0 %v835, 127
  %v841 = vpop.permute.xlu0 %840
  %842 = vrot.lane.b32.xlu0 %v836, 127
  %v843 = vpop.permute.xlu0 %842
  %844 = vrot.lane.b32.xlu0 %v837, 127
  %v845 = vpop.permute.xlu0 %844
  %v846 = vsel %vm151, %v307, %v839
  %v847 = vsel %vm151, %v839, %v841
  %v848 = vsel %vm151, %v841, %v843
  %v849 = vsel %vm151, %v843, %v845
  %859 = vrot.lane.b32.xlu0 %v802, 126
  %v860 = vpop.permute.xlu0 %859
  %861 = vrot.lane.b32.xlu0 %v803, 126
  %v862 = vpop.permute.xlu0 %861
  %863 = vrot.lane.b32.xlu0 %v804, 126
  %v864 = vpop.permute.xlu0 %863
  %865 = vrot.lane.b32.xlu0 %v805, 126
  %v866 = vpop.permute.xlu0 %865
  %v867 = vsel %vm340, %v331, %v860
  %v868 = vsel %vm340, %v860, %v862
  %v869 = vsel %vm340, %v862, %v864
  %v870 = vsel %vm340, %v864, %v866
  %v880 = vrot.slane %v806, 4
  %v881 = vrot.slane %v807, 4
  %v882 = vrot.slane %v808, 4
  %v883 = vrot.slane %v809, 4
  %884 = vrot.lane.b32.xlu0 %v880, 112
  %v885 = vpop.permute.xlu0 %884
  %886 = vrot.lane.b32.xlu0 %v881, 112
  %v887 = vpop.permute.xlu0 %886
  %888 = vrot.lane.b32.xlu0 %v882, 112
  %v889 = vpop.permute.xlu0 %888
  %890 = vrot.lane.b32.xlu0 %v883, 112
  %v891 = vpop.permute.xlu0 %890
  %v892 = vsel %vm93, %v361, %v885
  %v893 = vsel %vm93, %v885, %v887
  %v894 = vsel %vm93, %v887, %v889
  %v895 = vsel %vm93, %v889, %v891
  %905 = vrot.lane.b32.xlu0 %v810, 111
  %v906 = vpop.permute.xlu0 %905
  %907 = vrot.lane.b32.xlu0 %v811, 111
  %v908 = vpop.permute.xlu0 %907
  %909 = vrot.lane.b32.xlu0 %v812, 111
  %v910 = vpop.permute.xlu0 %909
  %911 = vrot.lane.b32.xlu0 %v813, 111
  %v912 = vpop.permute.xlu0 %911
  %v913 = vsel %vm64, %v906, %v908
  %v914 = vsel %vm64, %v908, %v910
  %v915 = vsel %vm64, %v910, %v912
  %v925 = vrot.slane %v814, 4
  %v926 = vrot.slane %v815, 4
  %v927 = vrot.slane %v816, 4
  %v928 = vrot.slane %v817, 4
  %929 = vrot.lane.b32.xlu0 %v925, 110
  %v930 = vpop.permute.xlu0 %929
  %931 = vrot.lane.b32.xlu0 %v926, 110
  %v932 = vpop.permute.xlu0 %931
  %933 = vrot.lane.b32.xlu0 %v927, 110
  %v934 = vpop.permute.xlu0 %933
  %935 = vrot.lane.b32.xlu0 %v928, 110
  %v936 = vpop.permute.xlu0 %935
  %v937 = vsel %vm419, %v930, %v932
  %v938 = vsel %vm419, %v932, %v934
  %v939 = vsel %vm419, %v934, %v936
  %v940 = vsel %vm419, %v936, %v418
  %950 = vrot.lane.b32.xlu0 %v818, 96
  %v951 = vpop.permute.xlu0 %950
  %952 = vrot.lane.b32.xlu0 %v819, 96
  %v953 = vpop.permute.xlu0 %952
  %954 = vrot.lane.b32.xlu0 %v820, 96
  %v955 = vpop.permute.xlu0 %954
  %956 = vrot.lane.b32.xlu0 %v821, 96
  %v957 = vpop.permute.xlu0 %956
  %v958 = vsel %vm444, %v951, %v953
  %v959 = vsel %vm444, %v953, %v955
  %v960 = vsel %vm444, %v955, %v957
  %v961 = vsel %vm444, %v957, %v443
  %v971 = vrot.slane %v822, 4
  %v972 = vrot.slane %v823, 4
  %v973 = vrot.slane %v824, 4
  %v974 = vrot.slane %v825, 4
  %975 = vrot.lane.b32.xlu0 %v971, 95
  %v976 = vpop.permute.xlu0 %975
  %977 = vrot.lane.b32.xlu0 %v972, 95
  %v978 = vpop.permute.xlu0 %977
  %979 = vrot.lane.b32.xlu0 %v973, 95
  %v980 = vpop.permute.xlu0 %979
  %981 = vrot.lane.b32.xlu0 %v974, 95
  %v982 = vpop.permute.xlu0 %981
  %v983 = vsel %vm474, %v976, %v978
  %v984 = vsel %vm474, %v978, %v980
  %v985 = vsel %vm474, %v980, %v982
  %v986 = vsel %vm474, %v982, %v473
  %996 = vrot.lane.b32.xlu0 %v826, 94
  %v997 = vpop.permute.xlu0 %996
  %998 = vrot.lane.b32.xlu0 %v827, 94
  %v999 = vpop.permute.xlu0 %998
  %1000 = vrot.lane.b32.xlu0 %v828, 94
  %v1001 = vpop.permute.xlu0 %1000
  %1002 = vrot.lane.b32.xlu0 %v829, 94
  %v1003 = vpop.permute.xlu0 %1002
  %v1004 = vsel %vm499, %v997, %v999
  %v1005 = vsel %vm499, %v999, %v1001
  %v1006 = vsel %vm499, %v1001, %v1003
  %v1007 = vsel %vm499, %v1003, %v498
  %v1008 = vsel %vm504, %v73, %v846
  %v1009 = vsel %vm504, %v794, %v847
  %v1010 = vsel %vm504, %v795, %v848
  %v1011 = vsel %vm504, %v796, %v849
  %v1012 = vsel %vm504, %v797, %v845
  %v1013 = vsel %vm504, %v867, %v892
  %v1014 = vsel %vm504, %v868, %v893
  %v1015 = vsel %vm504, %v869, %v894
  %v1016 = vsel %vm504, %v870, %v895
  %v1017 = vsel %vm504, %v866, %v891
  %v1018 = vsel %vm504, %v906, %v930
  %v1019 = vsel %vm504, %v913, %v937
  %v1020 = vsel %vm504, %v914, %v938
  %v1021 = vsel %vm504, %v915, %v939
  %v1022 = vsel %vm504, %v912, %v940
  %v1023 = vsel %vm504, %v951, %v976
  %v1024 = vsel %vm504, %v958, %v983
  %v1025 = vsel %vm504, %v959, %v984
  %v1026 = vsel %vm504, %v960, %v985
  %v1027 = vsel %vm504, %v961, %v986
  %v1028 = vld [vmem:[%s6] sm:$0xf]
  %v1029 = vld [vmem:[%s7] sm:$0xf]
  %1031 = vset.pattern.permute.xlu0 0
  %1032 = vperm.xlu0 %1031, %v1029
  %v1033 = vpop.permute.xlu0 %1032
  %1055 = vrot.lane.b32.xlu0 %v1008, 17
  %v1056 = vpop.permute.xlu0 %1055
  %1057 = vrot.lane.b32.xlu0 %v1009, 17
  %v1058 = vpop.permute.xlu0 %1057
  %1059 = vrot.lane.b32.xlu0 %v1010, 17
  %v1060 = vpop.permute.xlu0 %1059
  %1061 = vrot.lane.b32.xlu0 %v1011, 17
  %v1062 = vpop.permute.xlu0 %1061
  %1063 = vrot.lane.b32.xlu0 %v1012, 17
  %v1064 = vpop.permute.xlu0 %1063
  %1065 = vrot.lane.b32.xlu0 %v1013, 17
  %v1066 = vpop.permute.xlu0 %1065
  %1067 = vrot.lane.b32.xlu0 %v1014, 17
  %v1068 = vpop.permute.xlu0 %1067
  %1069 = vrot.lane.b32.xlu0 %v1015, 17
  %v1070 = vpop.permute.xlu0 %1069
  %1071 = vrot.lane.b32.xlu0 %v1016, 17
  %v1072 = vpop.permute.xlu0 %1071
  %1073 = vrot.lane.b32.xlu0 %v1017, 17
  %v1074 = vpop.permute.xlu0 %1073
  %1075 = vrot.lane.b32.xlu0 %v1018, 17
  %v1076 = vpop.permute.xlu0 %1075
  %1077 = vrot.lane.b32.xlu0 %v1019, 17
  %v1078 = vpop.permute.xlu0 %1077
  %1079 = vrot.lane.b32.xlu0 %v1020, 17
  %v1080 = vpop.permute.xlu0 %1079
  %1081 = vrot.lane.b32.xlu0 %v1021, 17
  %v1082 = vpop.permute.xlu0 %1081
  %1083 = vrot.lane.b32.xlu0 %v1022, 17
  %v1084 = vpop.permute.xlu0 %1083
  %1085 = vrot.lane.b32.xlu0 %v1023, 17
  %v1086 = vpop.permute.xlu0 %1085
  %1087 = vrot.lane.b32.xlu0 %v1024, 17
  %v1088 = vpop.permute.xlu0 %1087
  %1089 = vrot.lane.b32.xlu0 %v1025, 17
  %v1090 = vpop.permute.xlu0 %1089
  %1091 = vrot.lane.b32.xlu0 %v1026, 17
  %v1092 = vpop.permute.xlu0 %1091
  %1093 = vrot.lane.b32.xlu0 %v1027, 17
  %v1094 = vpop.permute.xlu0 %1093
  %1095 = vrot.lane.b32.xlu0 %v997, 17
  %v1096 = vpop.permute.xlu0 %1095
  %1097 = vrot.lane.b32.xlu0 %v1004, 17
  %v1098 = vpop.permute.xlu0 %1097
  %1099 = vrot.lane.b32.xlu0 %v1005, 17
  %v1100 = vpop.permute.xlu0 %1099
  %1101 = vrot.lane.b32.xlu0 %v1006, 17
  %v1102 = vpop.permute.xlu0 %1101
  %1103 = vrot.lane.b32.xlu0 %v1007, 17
  %v1104 = vpop.permute.xlu0 %1103
  %v1105 = vsel %vm282, %v1056, %v1058
  %v1106 = vsel %vm282, %v1058, %v1060
  %v1107 = vsel %vm282, %v1060, %v1062
  %v1108 = vsel %vm282, %v1062, %v1064
  %v1109 = vsel %vm282, %v1066, %v1068
  %v1110 = vsel %vm282, %v1068, %v1070
  %v1111 = vsel %vm282, %v1070, %v1072
  %v1112 = vsel %vm282, %v1072, %v1074
  %v1113 = vsel %vm282, %v1076, %v1078
  %v1114 = vsel %vm282, %v1078, %v1080
  %v1115 = vsel %vm282, %v1080, %v1082
  %v1116 = vsel %vm282, %v1082, %v1084
  %v1117 = vsel %vm282, %v1086, %v1088
  %v1118 = vsel %vm282, %v1088, %v1090
  %v1119 = vsel %vm282, %v1090, %v1092
  %v1120 = vsel %vm282, %v1092, %v1094
  %v1121 = vsel %vm282, %v1096, %v1098
  %v1122 = vsel %vm282, %v1098, %v1100
  %v1123 = vsel %vm282, %v1100, %v1102
  %v1124 = vsel %vm282, %v1102, %v1104
  %v1142 = vsel %vm638, %v1028, 0
  %v1144 = vsel %vm504, %v1121, 0
  %v1146 = vsel %vm504, %v1122, 0
  %v1148 = vsel %vm504, %v1123, 0
  %v1150 = vsel %vm504, %v1124, 0
  %1152 = vmatpush.msra.mxu0 0.0
  %1153 = vmatpush.msra.mxu0 0.0
  %1154 = vmatpush.msra.mxu0 0.0
  %1155 = vmatpush.msra.mxu0 0.0
  %1156 = vmatpush.msra.mxu0 0.0
  %1157 = vmatpush.msra.mxu0 0.0
  %1158 = vmatpush.msra.mxu0 0.0
  %1159 = vmatpush.msra.mxu0 0.0
  %1160 = vmatpush.msra.mxu0 0.0
  %1161 = vmatpush.msra.mxu0 0.0
  %1162 = vmatpush.msra.mxu0 0.0
  %1163 = vmatpush.msra.mxu0 %v1144
  %1164 = vmatpush.msra.mxu0 %v1117
  %1165 = vmatpush.msra.mxu0 %v1113
  %1166 = vmatpush.msra.mxu0 %v1109
  %1167 = vmatpush.msra.mxu0 %v1105
  %1168 = vmatmul.f32.gmra.mxu0 %v1142
  %v1169 = vpop.f32.mrf.mxu0
  %v1170 = vadd.f32 %v1033, %v1169
  %1171 = vdwg.mxu0
  %1172 = vmatpush.msra.mxu0 0.0
  %1173 = vmatpush.msra.mxu0 0.0
  %1174 = vmatpush.msra.mxu0 0.0
  %1175 = vmatpush.msra.mxu0 0.0
  %1176 = vmatpush.msra.mxu0 0.0
  %1177 = vmatpush.msra.mxu0 0.0
  %1178 = vmatpush.msra.mxu0 0.0
  %1179 = vmatpush.msra.mxu0 0.0
  %1180 = vmatpush.msra.mxu0 0.0
  %1181 = vmatpush.msra.mxu0 0.0
  %1182 = vmatpush.msra.mxu0 0.0
  %1183 = vmatpush.msra.mxu0 %v1146
  %1184 = vmatpush.msra.mxu0 %v1118
  %1185 = vmatpush.msra.mxu0 %v1114
  %1186 = vmatpush.msra.mxu0 %v1110
  %1187 = vmatpush.msra.mxu0 %v1106
  %1188 = vmatmul.f32.gmra.mxu0 %v1142
  %v1189 = vpop.f32.mrf.mxu0
  %v1190 = vadd.f32 %v1033, %v1189
  %1191 = vdwg.mxu0
  %1192 = vmatpush.msra.mxu0 0.0
  %1193 = vmatpush.msra.mxu0 0.0
  %1194 = vmatpush.msra.mxu0 0.0
  %1195 = vmatpush.msra.mxu0 0.0
  %1196 = vmatpush.msra.mxu0 0.0
  %1197 = vmatpush.msra.mxu0 0.0
  %1198 = vmatpush.msra.mxu0 0.0
  %1199 = vmatpush.msra.mxu0 0.0
  %1200 = vmatpush.msra.mxu0 0.0
  %1201 = vmatpush.msra.mxu0 0.0
  %1202 = vmatpush.msra.mxu0 0.0
  %1203 = vmatpush.msra.mxu0 %v1148
  %1204 = vmatpush.msra.mxu0 %v1119
  %1205 = vmatpush.msra.mxu0 %v1115
  %1206 = vmatpush.msra.mxu0 %v1111
  %1207 = vmatpush.msra.mxu0 %v1107
  %1208 = vmatmul.f32.gmra.mxu0 %v1142
  %v1209 = vpop.f32.mrf.mxu0
  %v1210 = vadd.f32 %v1033, %v1209
  %1211 = vdwg.mxu0
  %1212 = vmatpush.msra.mxu0 0.0
  %1213 = vmatpush.msra.mxu0 0.0
  %1214 = vmatpush.msra.mxu0 0.0
  %1215 = vmatpush.msra.mxu0 0.0
  %1216 = vmatpush.msra.mxu0 0.0
  %1217 = vmatpush.msra.mxu0 0.0
  %1218 = vmatpush.msra.mxu0 0.0
  %1219 = vmatpush.msra.mxu0 0.0
  %1220 = vmatpush.msra.mxu0 0.0
  %1221 = vmatpush.msra.mxu0 0.0
  %1222 = vmatpush.msra.mxu0 0.0
  %1223 = vmatpush.msra.mxu0 %v1150
  %1224 = vmatpush.msra.mxu0 %v1120
  %1225 = vmatpush.msra.mxu0 %v1116
  %1226 = vmatpush.msra.mxu0 %v1112
  %1227 = vmatpush.msra.mxu0 %v1108
  %1228 = vmatmul.f32.gmra.mxu0 %v1142
  %v1229 = vpop.f32.mrf.mxu0
  %v1230 = vadd.f32 %v1033, %v1229
  %1231 = vdwg.mxu0
  %v1232 = vsel %vm504, %v1170, 0.0
  %v1233 = vsel %vm504, %v1190, 0.0
  %v1234 = vadd.f32 %v1232, %v1233
  %v1235 = vsel %vm504, %v1210, 0.0
  %v1236 = vadd.f32 %v1234, %v1235
  %v1237 = vsel %vm504, %v1230, 0.0
  %v1238 = vadd.f32 %v1236, %v1237
  %1239 = vadd.xlane.f32.xlu0 %v1238
  %v1240 = vpop.xlane.xlu0 %1239
  %v1241 = vmul.f32 %v1170, %v1170
  %v1242 = vmul.f32 %v1190, %v1190
  %v1243 = vmul.f32 %v1210, %v1210
  %v1244 = vmul.f32 %v1230, %v1230
  %v1245 = vsel %vm504, %v1241, 0.0
  %v1246 = vsel %vm504, %v1242, 0.0
  %v1247 = vadd.f32 %v1245, %v1246
  %v1248 = vsel %vm504, %v1243, 0.0
  %v1249 = vadd.f32 %v1247, %v1248
  %v1250 = vsel %vm504, %v1244, 0.0
  %v1251 = vadd.f32 %v1249, %v1250
  %1252 = vadd.xlane.f32.xlu0 %v1251
  %v1253 = vpop.xlane.xlu0 %1252
  %v1254 = vmul.f32 %v1240, 0.001953125
  %v1255 = vmul.f32 %v1253, 0.001953125
  %v1256 = vmul.f32 %v1254, %v1254
  %v1257 = vsub.f32 %v1255, %v1256
  %v1258 = vld [vmem:[%s8] sm:$0xf]
  %v1259 = vadd.f32 %v1257, 1e-05
  %v1260 = vrsqrt.pop %v1259
  %v1261 = vmul.f32 %v1260, %v1259
  %v1262 = vmul.f32 %v1261, %v1260
  %v1263 = vmul.f32 0.5, %v1262
  %v1264 = vsub.f32 1.5, %v1263
  %v1265 = vmul.f32 %v1260, %v1264
  %vm1266 = vweird.f32 %v1259
  %vm1267 = vweird.f32 %v1260
  %vm1268 = vmor %vm1266, %vm1267
  %v1269 = vsel %vm1268, %v1260, %v1265
  %v1270 = vmul.f32 %v1258, %v1269
  %v1271 = vld [vmem:[%s9] sm:$0xf]
  %v1272 = vmul.f32 %v1254, %v1270
  %v1273 = vsub.f32 %v1271, %v1272
  %1275 = vset.pattern.permute.xlu0 0
  %1276 = vperm.xlu0 %1275, %v1270
  %v1277 = vpop.permute.xlu0 %1276
  %v1279 = vmul.f32 %v1170, %v1277
  %v1280 = vmul.f32 %v1190, %v1277
  %v1281 = vmul.f32 %v1210, %v1277
  %v1282 = vmul.f32 %v1230, %v1277
  %1284 = vset.pattern.permute.xlu0 0
  %1285 = vperm.xlu0 %1284, %v1273
  %v1286 = vpop.permute.xlu0 %1285
  %v1288 = vadd.f32 %v1279, %v1286
  %v1289 = vadd.f32 %v1280, %v1286
  %v1290 = vadd.f32 %v1281, %v1286
  %v1291 = vadd.f32 %v1282, %v1286
  %v1292 = vadd.f32 %v1288, %v40
  %v1293 = vadd.f32 %v1289, %v41
  %v1294 = vadd.f32 %v1290, %v46
  %v1295 = vadd.f32 %v1291, %v47
  %v1298 = vrot.slane %v1293, 4
  %v1299 = vsel %vm504, %v1292, %v1298
  %1301 = vst [vmem:[%s10] sm:$0xff] %v1299
  %v1304 = vrot.slane %v1295, 4
  %v1305 = vsel %vm504, %v1294, %v1304
  %s1307 = scalar_lea.vmem %s10, 8
  %1308 = vst [vmem:[%s1307] sm:$0xff] %v1305
  // Predicated region
  $region42: #{resblock_pallas.1} parent=0 // pred_check
    _
  $region43: #{resblock_pallas.1} parent=0 // pred_check_branch
    %1310 = sbr.rel (0) target = $region45
  $region44: #{resblock_pallas.1} parent=0 // pred_region
    _
  $region45: #{resblock_pallas.1} parent=0 // pred_fallthru
    _
  // Predicated region
  $region46: #{resblock_pallas.1} parent=0 // pred_check
    _
  $region47: #{resblock_pallas.1} parent=0 // pred_check_branch
    %1312 = sbr.rel (0) target = $region49
  $region48: #{resblock_pallas.1} parent=0 // pred_region
    _
  $region49: #{resblock_pallas.1} parent=0 // pred_fallthru
    _

</llo_original>
